<compile_context>
chip_gen: v6e
topology: v6e:2x2x1
jax: 0.10.0
libtpu: 0.0.40
codegen_flags: <defaults>
</compile_context>

<pallas_src>
import jax
import jax.numpy as jnp
from jax.experimental import pallas as pl
from jax.experimental.pallas import tpu as pltpu


def _double_kernel(a_ref, o_ref):
    a = a_ref[...]
    # forward(a, b) = (a + b) + (a - b) == 2 * a
    o_ref[...] = a + a


def _pick_tile(dim: int, unit: int, target_units: int) -> int:
    """Largest multiple of `unit` that divides `dim` and is <= target_units*unit.

    Falls back to the full dim when the dim is not unit-aligned (a full-extent
    block is always legal) or when no suitable divisor exists.
    """
    if dim % unit != 0:
        return dim
    target = target_units * unit
    if dim <= target:
        return dim
    t = target
    while t >= unit:
        if dim % t == 0:
            return t
        t -= unit
    return dim


def _choose_tiles(M: int, N: int, itemsize: int) -> tuple[int, int]:
    LANE = 128
    # Packed-dtype minimum sublane tile: f32 -> 8, bf16 -> 16, int8/fp8 -> 32.
    sub = max(8, 32 // max(1, itemsize))
    # Lane (last) dim: keep blocks lane-dense, up to 2048 lanes per block.
    tn = _pick_tile(N, LANE, 16)
    # Sublane dim: fill up to ~4 MiB per block (double-buffered in + out < 16 MiB).
    max_rows = max(sub, (4 * 1024 * 1024) // max(1, tn * itemsize))
    target_rows = min(1024, max_rows)
    tm = _pick_tile(M, sub, max(1, target_rows // sub))
    return tm, tn


def model_forward(a: jax.Array, b: jax.Array) -> jax.Array:
    assert a.shape == b.shape and a.dtype == b.dtype
    assert a.ndim == 2
    # `b` cancels algebraically ((a+b)+(a-b) == 2a), so it is never streamed.
    M, N = a.shape
    tm, tn = _choose_tiles(M, N, a.dtype.itemsize)
    grid = (pl.cdiv(M, tm), pl.cdiv(N, tn))
    return pl.pallas_call(
        _double_kernel,
        out_shape=jax.ShapeDtypeStruct((M, N), a.dtype),
        grid=grid,
        in_specs=[pl.BlockSpec((tm, tn), lambda i, j: (i, j))],
        out_specs=pl.BlockSpec((tm, tn), lambda i, j: (i, j)),
        compiler_params=pltpu.CompilerParams(
            dimension_semantics=("parallel", "parallel"),
            vmem_limit_bytes=32 * 1024 * 1024,
        ),
    )(a)


if __name__ == "__main__":
    key = jax.random.PRNGKey(0)
    ka, kb = jax.random.split(key)

    # Small test shape consistent with the module: (16, 128) f32 -> single block.
    a = jax.random.normal(ka, (16, 128), dtype=jnp.float32)
    b = jax.random.normal(kb, (16, 128), dtype=jnp.float32)
    out = model_forward(a, b)
    jax.block_until_ready(out)
    ref = (a + b) + (a - b)
    assert out.shape == ref.shape and out.dtype == ref.dtype
    assert jnp.allclose(out, ref, atol=1e-6, rtol=1e-6), "mismatch (small)"

    # Moderate shape to exercise the tiled multi-block path (grid > 1).
    a2 = jax.random.normal(ka, (2048, 512), dtype=jnp.float32)
    b2 = jax.random.normal(kb, (2048, 512), dtype=jnp.float32)
    out2 = model_forward(a2, b2)
    jax.block_until_ready(out2)
    ref2 = (a2 + b2) + (a2 - b2)
    assert jnp.allclose(out2, ref2, atol=1e-6, rtol=1e-6), "mismatch (tiled)"

    print("KERNEL_OK")
</pallas_src>

<mosaic_0001>
module attributes {stable_mosaic.version = 11 : i64} {
  func.func @_double_kernel(%arg0: i32, %arg1: i32, %arg2: memref<16x128xf32, #tpu.memory_space<vmem>>, %arg3: memref<16x128xf32, #tpu.memory_space<vmem>>) attributes {dimension_semantics = [#tpu.dimension_semantics<parallel>, #tpu.dimension_semantics<parallel>], iteration_bounds = array<i64: 1, 1>, scalar_prefetch = 0 : i64, scratch_operands = 0 : i64, tpu.core_type = #tpu.core_type<tc>, window_params = [{transform_indices = @transform_0, window_bounds = array<i64: 16, 128>}, {transform_indices = @transform_1, window_bounds = array<i64: 16, 128>}]} {
    %c0 = arith.constant 0 : index
    %c0_0 = arith.constant 0 : index
    %0 = vector.load %arg2[%c0, %c0_0] : memref<16x128xf32, #tpu.memory_space<vmem>>, vector<16x128xf32>
    %1 = arith.addf %0, %0 : vector<16x128xf32>
    %c0_1 = arith.constant 0 : index
    %c0_2 = arith.constant 0 : index
    %2 = vector.load %arg3[%c0_1, %c0_2] : memref<16x128xf32, #tpu.memory_space<vmem>>, vector<16x128xf32>
    tpu.vector_store %arg3[%c0_1, %c0_2], %1 {strides = array<i32>} : memref<16x128xf32, #tpu.memory_space<vmem>>, vector<16x128xf32>,
    return
  }
  func.func @transform_0(%arg0: i32, %arg1: i32) -> (i32, i32) {
    %c0_i32 = arith.constant 0 : i32
    return %arg0, %arg1 : i32, i32
  }
  func.func @transform_1(%arg0: i32, %arg1: i32) -> (i32, i32) {
    %c0_i32 = arith.constant 0 : i32
    return %arg0, %arg1 : i32, i32
  }
}

</mosaic_0001>

<llo_original>
// kernel: tpu_custom_call.1
$region0: #{tpu_custom_call.1}
  #allocation0 [shape = 'u32[]', space=smem, size = 0x4, offset = 0x4, fixed_abs, tag = 'smem constant byte address 0x4 - core index']
  #allocation1 [shape = 'u32[144,128]{1,0:T(1,128)}', space=vmem, size = 0x12000, scoped, tag = 'internal scratch']
  %s0 = inlined_call_operand.hbm [shape: f32[16,128], index: 0, kind: input, shape index: {}]
  %s1 = inlined_call_operand.hbm [shape: f32[16,128], index: 1, kind: output, shape index: {}]
  %s2 = sld [smem:[#allocation0]]
  $region18: #{tpu_custom_call.1} parent=0
    _
  %s4 = ssub.s32 1, %s2
  %s5 = scalar_select 0, %s4, %s2
  $region1: #{tpu_custom_call.1} parent=0
    #allocation2 [shape = 'u8[8192]{0}', space=vmem, size = 0x2000, scoped, tag = 'input window, operand 0, single buffered']
    #allocation3 [shape = 's32[1]{0}', space=sflag, size = 0x4, scoped, tag = 'scoped memory for tpu_custom_call.1']
    #allocation4 [shape = 's32[1]{0}', space=sflag, size = 0x4, scoped, tag = 'scoped memory for tpu_custom_call.1']
    #allocation5 [shape = 'u8[8192]{0}', space=vmem, size = 0x2000, scoped, tag = 'output window, operand 0, single buffered']
    %6 = vsyncpa [#allocation3], 0
    %7 = vsyncpa [#allocation4], 0
    // Predicated region
    $region2: #{tpu_custom_call.1} parent=1 // pred_check
      _
    $region3: #{tpu_custom_call.1} parent=1 // pred_check_branch
      %9 = sbr.rel (0) target = $region5
    $region4: #{tpu_custom_call.1} parent=1 // pred_region
      %s11 = ssub.s32 256, 256
      %12 = vsyncadd [#allocation3], %s11
      %s13 = sshll.u32 [#allocation2], 4
      %s14 = int_to_ptr.vmem [resolvable:$true] %s13
      %19 = dma.hbm_to_vmem [thread:$0]  %s0, 256, %s14, [#allocation3], 128, 128, 8
    $region5: #{tpu_custom_call.1} parent=1 // pred_fallthru
      _
    // Predicated region
    $region6: #{tpu_custom_call.1} parent=1 // pred_check
      _
    $region7: #{tpu_custom_call.1} parent=1 // pred_check_branch
      %21 = sbr.rel (0) target = $region9
    $region8: #{tpu_custom_call.1} parent=1 // pred_region
      %22 = dma.done [#allocation3], 256
    $region9: #{tpu_custom_call.1} parent=1 // pred_fallthru
      _
    %v23 = vld [vmem:[#allocation2] sm:$0xff]
    %v24 = vld [vmem:[#allocation2 + $0x8] sm:$0xff]
    %v25 = vadd.f32 %v23, %v23
    %v26 = vadd.f32 %v24, %v24
    %27 = vst [vmem:[#allocation5] sm:$0xff] %v25
    %28 = vst [vmem:[#allocation5 + $0x8] sm:$0xff] %v26
    // Predicated region
    $region10: #{tpu_custom_call.1} parent=1 // pred_check
      _
    $region11: #{tpu_custom_call.1} parent=1 // pred_check_branch
      %30 = sbr.rel (0) target = $region13
    $region12: #{tpu_custom_call.1} parent=1 // pred_region
      %s32 = ssub.s32 256, 256
      %33 = vsyncadd [#allocation4], %s32
      %s34 = sshll.u32 [#allocation5], 4
      %s35 = int_to_ptr.vmem [resolvable:$true] %s34
      %40 = dma.vmem_to_hbm [thread:$0]  %s35, 256, %s1, [#allocation4], 128, 128, 8
    $region13: #{tpu_custom_call.1} parent=1 // pred_fallthru
      _
    // Predicated region
    $region14: #{tpu_custom_call.1} parent=1 // pred_check
      _
    $region15: #{tpu_custom_call.1} parent=1 // pred_check_branch
      %42 = sbr.rel (0) target = $region17
    $region16: #{tpu_custom_call.1} parent=1 // pred_region
      %43 = dma.done [#allocation4], 256
    $region17: #{tpu_custom_call.1} parent=1 // pred_fallthru
      _
    %44 = vsyncpa [#allocation3], 1
    %45 = vsyncpa [#allocation4], 1

</llo_original>
